<compile_context>
chip_gen: v7x
topology: tpu7x:2x2x1
jax: 0.10.0
libtpu: 0.0.40
codegen_flags: <defaults>
</compile_context>

<pallas_src>
import functools

import jax
import jax.numpy as jnp
from jax import lax
from jax.experimental import pallas as pl
from jax.experimental.pallas import tpu as pltpu


def _round_up(x, m):
    return ((x + m - 1) // m) * m


def _sublane_tile(dtype):
    return {4: 8, 2: 16, 1: 32}[jnp.dtype(dtype).itemsize]


def _vmem_limit(est_bytes):
    # 2x headroom, floor 16 MiB, cap below v7x physical (64 MiB).
    return int(min(max(2 * est_bytes, 16 * 1024 * 1024), 60 * 1024 * 1024))


_FUSED_VMEM_BUDGET = 24 * 1024 * 1024  # estimated per-step bytes for the fused path


def _fused_est_bytes(bt, c_pad, hw_pad, itemsize):
    return (4 * bt * c_pad * hw_pad * itemsize   # in + out blocks, double-buffered
            + bt * c_pad * hw_pad * 4            # feat_e (f32)
            + 3 * bt * c_pad * c_pad * 4)        # s / e / attn temps (f32)


# ---------------------------------------------------------------------------
# Fused path: whole (C_pad, HW_pad) tile per batch group.
# ---------------------------------------------------------------------------
def _cam_fused_kernel(beta_ref, x_ref, o_ref, *, c_real, c_pad):
    x = x_ref[...]                                    # (bt, C_pad, HW_pad), native dtype
    # s[b] = x[b] @ x[b]^T  (contract HW) — MXU-native "q @ k^T" pattern.
    s = lax.dot_general(
        x, x,
        dimension_numbers=(((2,), (2,)), ((0,), (0,))),
        preferred_element_type=jnp.float32)           # (bt, C_pad, C_pad) f32

    # softmax(rowmax(s) - s) == softmax(rowmin(s) - s); single reduction, arg <= 0.
    a = jnp.min(s, axis=-1, keepdims=True) - s
    e = jnp.exp(a)
    if c_real < c_pad:                                # mask zero-padded channels
        col = lax.broadcasted_iota(jnp.int32, e.shape, 2)
        e = jnp.where(col < c_real, e, 0.0)
    denom = jnp.sum(e, axis=-1, keepdims=True)
    attn = (e * pl.reciprocal(denom, approx=True)).astype(x.dtype)

    feat_e = lax.dot_general(
        attn, x,
        dimension_numbers=(((2,), (1,)), ((0,), (0,))),
        preferred_element_type=jnp.float32)           # (bt, C_pad, HW_pad) f32

    beta = beta_ref[0]                                # SMEM scalar
    o_ref[...] = (beta * feat_e).astype(o_ref.dtype) + x


def _cam_fused(beta_arr, x_flat, bt, c_real):
    B, c_pad, hw_pad = x_flat.shape
    itemsize = jnp.dtype(x_flat.dtype).itemsize
    est = _fused_est_bytes(bt, c_pad, hw_pad, itemsize)
    kernel = functools.partial(_cam_fused_kernel, c_real=c_real, c_pad=c_pad)
    return pl.pallas_call(
        kernel,
        out_shape=jax.ShapeDtypeStruct((B, c_pad, hw_pad), x_flat.dtype),
        grid_spec=pltpu.PrefetchScalarGridSpec(
            num_scalar_prefetch=0,
            grid=(B // bt,),
            in_specs=[
                pl.BlockSpec(memory_space=pltpu.MemorySpace.SMEM),         # beta (1,)
                pl.BlockSpec((bt, c_pad, hw_pad), lambda b: (b, 0, 0)),    # x tile
            ],
            out_specs=pl.BlockSpec((bt, c_pad, hw_pad), lambda b: (b, 0, 0)),
        ),
        compiler_params=pltpu.CompilerParams(
            dimension_semantics=("parallel",),
            vmem_limit_bytes=_vmem_limit(est),
        ),
    )(beta_arr, x_flat)


# ---------------------------------------------------------------------------
# Streamed path: two kernels, HW streamed in lane-aligned chunks.
# ---------------------------------------------------------------------------
def _cam_attn_kernel(x_ref, attn_ref, s_acc, *, c_real, c_pad):
    # Phase 1: accumulate S = x @ x^T over HW chunks; softmax once at the end.
    k = pl.program_id(1)

    @pl.when(k == 0)
    def _():
        s_acc[...] = jnp.zeros_like(s_acc)

    x = x_ref[0]                                      # (C_pad, chunk), native dtype
    s_acc[...] += lax.dot_general(
        x, x,
        dimension_numbers=(((1,), (1,)), ((), ())),
        preferred_element_type=jnp.float32)

    @pl.when(k == pl.num_programs(1) - 1)
    def _():
        s = s_acc[...]
        a = jnp.min(s, axis=-1, keepdims=True) - s    # == softmax(rowmax - s)
        e = jnp.exp(a)
        if c_real < c_pad:
            col = lax.broadcasted_iota(jnp.int32, e.shape, 1)
            e = jnp.where(col < c_real, e, 0.0)
        denom = jnp.sum(e, axis=-1, keepdims=True)
        attn = e * pl.reciprocal(denom, approx=True)
        attn_ref[0] = attn.astype(attn_ref.dtype)


def _cam_apply_kernel(beta_ref, attn_ref, x_ref, o_ref):
    # Phase 2: out_chunk = beta * (attn @ x_chunk) + x_chunk
    x = x_ref[0]                                      # (C_pad, chunk), native dtype
    attn = attn_ref[0]                                # (C_pad, C_pad), native dtype
    feat_e = jnp.dot(attn, x, preferred_element_type=jnp.float32)
    beta = beta_ref[0]
    o_ref[0] = (beta * feat_e).astype(o_ref.dtype) + x


def _cam_streamed(beta_arr, x_flat, c_real, hw_chunk):
    B, c_pad, hw_pad = x_flat.shape
    itemsize = jnp.dtype(x_flat.dtype).itemsize

    if hw_chunk is None:
        hw_chunk = min(hw_pad, 512)
    hw_chunk = min(_round_up(hw_chunk, 128), _round_up(hw_pad, 128))
    hw_pad2 = _round_up(hw_pad, hw_chunk)
    if hw_pad2 != hw_pad:
        x_flat = jnp.pad(x_flat, ((0, 0), (0, 0), (0, hw_pad2 - hw_pad)))
    n_chunks = hw_pad2 // hw_chunk

    est_a = (2 * c_pad * hw_chunk * itemsize + 2 * c_pad * c_pad * itemsize
             + 4 * c_pad * c_pad * 4)
    est_b = (4 * c_pad * hw_chunk * itemsize + 2 * c_pad * c_pad * itemsize
             + c_pad * hw_chunk * 4 + c_pad * c_pad * 4)

    # Kernel A: per-batch (C, C) attention matrix.
    attn = pl.pallas_call(
        functools.partial(_cam_attn_kernel, c_real=c_real, c_pad=c_pad),
        out_shape=jax.ShapeDtypeStruct((B, c_pad, c_pad), x_flat.dtype),
        grid_spec=pltpu.PrefetchScalarGridSpec(
            num_scalar_prefetch=0,
            grid=(B, n_chunks),
            in_specs=[
                pl.BlockSpec((1, c_pad, hw_chunk), lambda b, k: (b, 0, k)),
            ],
            out_specs=pl.BlockSpec((1, c_pad, c_pad), lambda b, k: (b, 0, 0)),
            scratch_shapes=[pltpu.VMEM((c_pad, c_pad), jnp.float32)],
        ),
        compiler_params=pltpu.CompilerParams(
            dimension_semantics=("parallel", "arbitrary"),
            vmem_limit_bytes=_vmem_limit(est_a),
        ),
    )(x_flat)

    # Kernel B: apply attention + residual, streaming HW chunks.
    out_flat = pl.pallas_call(
        _cam_apply_kernel,
        out_shape=jax.ShapeDtypeStruct((B, c_pad, hw_pad2), x_flat.dtype),
        grid_spec=pltpu.PrefetchScalarGridSpec(
            num_scalar_prefetch=0,
            grid=(B, n_chunks),
            in_specs=[
                pl.BlockSpec(memory_space=pltpu.MemorySpace.SMEM),            # beta
                pl.BlockSpec((1, c_pad, c_pad), lambda b, k: (b, 0, 0)),      # attn
                pl.BlockSpec((1, c_pad, hw_chunk), lambda b, k: (b, 0, k)),   # x chunk
            ],
            out_specs=pl.BlockSpec((1, c_pad, hw_chunk), lambda b, k: (b, 0, k)),
        ),
        compiler_params=pltpu.CompilerParams(
            dimension_semantics=("parallel", "parallel"),
            vmem_limit_bytes=_vmem_limit(est_b),
        ),
    )(beta_arr, attn, x_flat)
    return out_flat


# ---------------------------------------------------------------------------
# Public wrapper.
# ---------------------------------------------------------------------------
def channel_attention(x_nchw, beta, *, force_streamed=False, hw_chunk=None):
    """DANet channel attention: out = beta * softmax(rowmax(A)-A) @ feat + x."""
    B, C, H, W = x_nchw.shape
    HW = H * W
    dtype = x_nchw.dtype
    itemsize = jnp.dtype(dtype).itemsize

    c_pad = _round_up(C, _sublane_tile(dtype))
    hw_pad = _round_up(HW, 128)

    x_flat = x_nchw.reshape(B, C, HW)
    if c_pad != C or hw_pad != HW:
        # Zero padding: padded HW columns contribute nothing to x @ x^T and
        # produce zero output columns; padded channels are masked in-kernel.
        x_flat = jnp.pad(x_flat, ((0, 0), (0, c_pad - C), (0, hw_pad - HW)))

    beta_arr = jnp.reshape(jnp.asarray(beta, dtype=jnp.float32), (1,))

    use_streamed = force_streamed or (
        _fused_est_bytes(1, c_pad, hw_pad, itemsize) > _FUSED_VMEM_BUDGET)

    if use_streamed:
        out_flat = _cam_streamed(beta_arr, x_flat, C, hw_chunk)
    else:
        # Pack as many batch elements per grid step as the VMEM budget allows.
        bt = 1
        for cand in range(B, 0, -1):
            if B % cand == 0 and _fused_est_bytes(cand, c_pad, hw_pad, itemsize) <= _FUSED_VMEM_BUDGET:
                bt = cand
                break
        out_flat = _cam_fused(beta_arr, x_flat, bt, C)

    return out_flat[:, :C, :HW].reshape(B, C, H, W)


def channel_attention_ref(x, beta):
    """Pure-JAX reference mirroring the PyTorch module."""
    B, C, H, W = x.shape
    feat_a = x.reshape(B, C, H * W)
    attn = jnp.einsum("bcm,bdm->bcd", feat_a, feat_a)
    attn_new = jnp.max(attn, axis=-1, keepdims=True) - attn
    attn = jax.nn.softmax(attn_new, axis=-1)
    feat_e = jnp.einsum("bcd,bdm->bcm", attn, feat_a).reshape(B, C, H, W)
    return beta * feat_e + x


if __name__ == "__main__":
    key = jax.random.PRNGKey(0)
    B, C, H, W = 2, 8, 16, 16
    x = jax.random.normal(key, (B, C, H, W), dtype=jnp.float32)

    # Module __init__: beta = nn.Parameter(torch.zeros(1)) -> identity path.
    out0 = channel_attention(x, jnp.float32(0.0))
    jax.block_until_ready(out0)
    assert out0.shape == x.shape
    assert jnp.allclose(out0, x, atol=1e-5, rtol=1e-5)

    # Nonzero beta: fused path and streamed path vs pure-JAX reference.
    beta_test = jnp.float32(0.5)
    ref = channel_attention_ref(x, beta_test)
    out_fused = channel_attention(x, beta_test)
    out_streamed = channel_attention(x, beta_test, force_streamed=True, hw_chunk=128)
    jax.block_until_ready((out_fused, out_streamed))
    assert jnp.allclose(out_fused, ref, atol=5e-3, rtol=5e-3)
    assert jnp.allclose(out_streamed, ref, atol=5e-3, rtol=5e-3)

    # Non-aligned shape: exercises channel/HW zero-padding + softmax masking.
    x2 = jax.random.normal(jax.random.PRNGKey(1), (2, 6, 10, 10), dtype=jnp.float32)
    ref2 = channel_attention_ref(x2, beta_test)
    out2 = channel_attention(x2, beta_test)
    jax.block_until_ready(out2)
    assert jnp.allclose(out2, ref2, atol=5e-3, rtol=5e-3)

    print("KERNEL_OK")
</pallas_src>

<mosaic_0001>
module attributes {stable_mosaic.version = 11 : i64} {
  func.func @_cam_fused_kernel(%arg0: i32, %arg1: memref<1xf32, #tpu.memory_space<smem>>, %arg2: memref<2x8x256xf32, #tpu.memory_space<vmem>>, %arg3: memref<2x8x256xf32, #tpu.memory_space<vmem>>) attributes {dimension_semantics = [#tpu.dimension_semantics<parallel>], iteration_bounds = array<i64: 1>, scalar_prefetch = 0 : i64, scratch_operands = 0 : i64, tpu.core_type = #tpu.core_type<tc>, window_params = [{transform_indices = @transform_0, window_bounds = array<i64: 1>}, {transform_indices = @transform_1, window_bounds = array<i64: 2, 8, 256>}, {transform_indices = @transform_2, window_bounds = array<i64: 2, 8, 256>}]} {
    %c0 = arith.constant 0 : index
    %c0_0 = arith.constant 0 : index
    %c0_1 = arith.constant 0 : index
    %0 = vector.load %arg2[%c0, %c0_0, %c0_1] : memref<2x8x256xf32, #tpu.memory_space<vmem>>, vector<2x8x256xf32>
    %cst = arith.constant dense<0.000000e+00> : vector<2x8x8xf32>
    %1 = tpu.matmul %0, %0, %cst {dimension_numbers = #tpu.dot_dimension_numbers<[2], [2], [1], [1], [0, 0, 0, 1, 1, 1], [0], [0]>} : vector<2x8x256xf32>, vector<2x8x256xf32>, vector<2x8x8xf32> -> vector<2x8x8xf32>
    %cst_2 = arith.constant dense<0x7F800000> : vector<2x8xf32>
    %2 = vector.multi_reduction <minimumf>, %1, %cst_2 [2] : vector<2x8x8xf32> to vector<2x8xf32>
    %3 = vector.shape_cast %2 : vector<2x8xf32> to vector<2x8x1xf32>
    %4 = vector.broadcast %3 : vector<2x8x1xf32> to vector<2x8x8xf32>
    %5 = arith.subf %4, %1 : vector<2x8x8xf32>
    %6 = math.exp %5 : vector<2x8x8xf32>
    %cst_3 = arith.constant dense<0.000000e+00> : vector<2x8xf32>
    %7 = vector.multi_reduction <add>, %6, %cst_3 [2] : vector<2x8x8xf32> to vector<2x8xf32>
    %8 = vector.shape_cast %7 : vector<2x8xf32> to vector<2x8x1xf32>
    %9 = tpu.reciprocal %8 {approx = true} : vector<2x8x1xf32> -> vector<2x8x1xf32>
    %10 = vector.broadcast %9 : vector<2x8x1xf32> to vector<2x8x8xf32>
    %11 = arith.mulf %6, %10 : vector<2x8x8xf32>
    %cst_4 = arith.constant dense<0.000000e+00> : vector<2x8x256xf32>
    %12 = tpu.matmul %11, %0, %cst_4 {dimension_numbers = #tpu.dot_dimension_numbers<[2], [1], [1], [2], [0, 0, 0, 1, 1, 2], [0], [0]>} : vector<2x8x8xf32>, vector<2x8x256xf32>, vector<2x8x256xf32> -> vector<2x8x256xf32>
    %c0_5 = arith.constant 0 : index
    %13 = memref.load %arg1[%c0_5] : memref<1xf32, #tpu.memory_space<smem>>
    %14 = vector.broadcast %13 : f32 to vector<2x8x256xf32>
    %15 = arith.mulf %14, %12 : vector<2x8x256xf32>
    %16 = arith.addf %15, %0 : vector<2x8x256xf32>
    %c0_6 = arith.constant 0 : index
    %c0_7 = arith.constant 0 : index
    %c0_8 = arith.constant 0 : index
    %17 = vector.load %arg3[%c0_6, %c0_7, %c0_8] : memref<2x8x256xf32, #tpu.memory_space<vmem>>, vector<2x8x256xf32>
    tpu.vector_store %arg3[%c0_6, %c0_7, %c0_8], %16 {strides = array<i32>} : memref<2x8x256xf32, #tpu.memory_space<vmem>>, vector<2x8x256xf32>,
    return
  }
  func.func @transform_0(%arg0: i32) -> i32 {
    %c0_i32 = arith.constant 0 : i32
    %c0_i32_0 = arith.constant 0 : i32
    return %c0_i32 : i32
  }
  func.func @transform_1(%arg0: i32) -> (i32, i32, i32) {
    %c0_i32 = arith.constant 0 : i32
    %c0_i32_0 = arith.constant 0 : i32
    %c0_i32_1 = arith.constant 0 : i32
    return %arg0, %c0_i32, %c0_i32_0 : i32, i32, i32
  }
  func.func @transform_2(%arg0: i32) -> (i32, i32, i32) {
    %c0_i32 = arith.constant 0 : i32
    %c0_i32_0 = arith.constant 0 : i32
    %c0_i32_1 = arith.constant 0 : i32
    return %arg0, %c0_i32, %c0_i32_0 : i32, i32, i32
  }
}

</mosaic_0001>

<llo_original>
// kernel: tpu_custom_call.1
$region0: #{tpu_custom_call.1}
  #allocation0 [shape = 'u32[]', space=smem, size = 0x4, offset = 0x4, fixed_abs, tag = 'smem constant byte address 0x4 - core index']
  #allocation1 [shape = 'u32[144,128]{1,0:T(1,128)}', space=vmem, size = 0x12000, scoped, tag = 'internal scratch']
  #allocation2 [shape = 'f32[1]{0:T(128)S(6)}', space=smem, size = 0x200, scoped, tag = 'scoped memory for tpu_custom_call.1']
  %s0 = inlined_call_operand.<no memory space> [shape: f32[1], index: 0, kind: input, shape index: {}]
  %s1 = inlined_call_operand.hbm [shape: f32[2,8,256], index: 1, kind: input, shape index: {}]
  %s2 = inlined_call_operand.hbm [shape: f32[2,8,256], index: 2, kind: output, shape index: {}]
  %s3 = sld [smem:[#allocation0]]
  $region22: #{tpu_custom_call.1} parent=0
    _
  %s5 = ssub.s32 1, %s3
  %s6 = scalar_select 0, %s5, %s3
  %7 = sst [smem:[#allocation2]] %s0
  $region1: #{tpu_custom_call.1} parent=0
    #allocation3 [shape = 'u8[16384]{0}', space=vmem, size = 0x4000, scoped, tag = 'input window, operand 1, single buffered']
    #allocation4 [shape = 's32[1]{0}', space=sflag, size = 0x4, scoped, tag = 'scoped memory for tpu_custom_call.1']
    #allocation5 [shape = 's32[1]{0}', space=sflag, size = 0x4, scoped, tag = 'scoped memory for tpu_custom_call.1']
    #allocation6 [shape = 'u8[16384]{0}', space=vmem, size = 0x4000, scoped, tag = 'output window, operand 0, single buffered']
    %8 = vsyncpa [#allocation4], 0
    %9 = vsyncpa [#allocation5], 0
    // Predicated region
    $region2: #{tpu_custom_call.1} parent=1 // pred_check
      _
    $region3: #{tpu_custom_call.1} parent=1 // pred_check_branch
      %11 = sbr.rel (0) target = $region5
    $region4: #{tpu_custom_call.1} parent=1 // pred_region
      _
    $region5: #{tpu_custom_call.1} parent=1 // pred_fallthru
      _
    // Predicated region
    $region6: #{tpu_custom_call.1} parent=1 // pred_check
      _
    $region7: #{tpu_custom_call.1} parent=1 // pred_check_branch
      %13 = sbr.rel (0) target = $region9
    $region8: #{tpu_custom_call.1} parent=1 // pred_region
      %s15 = ssub.s32 512, 512
      %16 = vsyncadd [#allocation4], %s15
      %s17 = sshll.u32 [#allocation3], 4
      %s18 = int_to_ptr.vmem [resolvable:$true] %s17
      %23 = dma.hbm_to_vmem [thread:$0]  %s1, 512, %s18, [#allocation4], 256, 256, 16
    $region9: #{tpu_custom_call.1} parent=1 // pred_fallthru
      _
    // Predicated region
    $region10: #{tpu_custom_call.1} parent=1 // pred_check
      _
    $region11: #{tpu_custom_call.1} parent=1 // pred_check_branch
      %25 = sbr.rel (0) target = $region13
    $region12: #{tpu_custom_call.1} parent=1 // pred_region
      %26 = dma.done [#allocation4], 512
    $region13: #{tpu_custom_call.1} parent=1 // pred_fallthru
      _
    %v27 = vld [vmem:[#allocation3] sm:$0xff]
    %v28 = vld [vmem:[#allocation3 + $0x8] sm:$0xff]
    %v29 = vld [vmem:[#allocation3 + $0x10] sm:$0xff]
    %v30 = vld [vmem:[#allocation3 + $0x18] sm:$0xff]
    %31 = vmatprep.subr.mxu0 %v28
    %32 = vmatpush1.xpose.msra.mxu0 %v27
    %33 = vmatprep.subr.mxu0 0.0
    %34 = vmatpush1.xpose.msra.mxu0 0.0
    %35 = vmatprep.subr.mxu0 0.0
    %36 = vmatpush1.xpose.msra.mxu0 0.0
    %37 = vmatprep.subr.mxu0 0.0
    %38 = vmatpush1.xpose.msra.mxu0 0.0
    %39 = vmatprep.subr.mxu0 0.0
    %40 = vmatpush1.xpose.msra.mxu0 0.0
    %41 = vmatprep.subr.mxu0 0.0
    %42 = vmatpush1.xpose.msra.mxu0 0.0
    %43 = vmatprep.subr.mxu0 0.0
    %44 = vmatpush1.xpose.msra.mxu0 0.0
    %45 = vmatprep.subr.mxu0 0.0
    %46 = vmatpush1.xpose.msra.mxu0 0.0
    %47 = vmatprep.subr.mxu0 0.0
    %48 = vmatpush1.xpose.msra.mxu0 0.0
    %49 = vmatprep.subr.mxu0 0.0
    %50 = vmatpush1.xpose.msra.mxu0 0.0
    %51 = vmatprep.subr.mxu0 0.0
    %52 = vmatpush1.xpose.msra.mxu0 0.0
    %53 = vmatprep.subr.mxu0 0.0
    %54 = vmatpush1.xpose.msra.mxu0 0.0
    %55 = vmatprep.subr.mxu0 0.0
    %56 = vmatpush1.xpose.msra.mxu0 0.0
    %57 = vmatprep.subr.mxu0 0.0
    %58 = vmatpush1.xpose.msra.mxu0 0.0
    %59 = vmatprep.subr.mxu0 0.0
    %60 = vmatpush1.xpose.msra.mxu0 0.0
    %61 = vmatprep.subr.mxu0 0.0
    %62 = vmatpush1.xpose.msra.mxu0 0.0
    %63 = vmatprep.subr.mxu0 0.0
    %64 = vmatpush1.xpose.msra.mxu0 0.0
    %65 = vmatprep.subr.mxu0 0.0
    %66 = vmatpush1.xpose.msra.mxu0 0.0
    %67 = vmatprep.subr.mxu0 0.0
    %68 = vmatpush1.xpose.msra.mxu0 0.0
    %69 = vmatprep.subr.mxu0 0.0
    %70 = vmatpush1.xpose.msra.mxu0 0.0
    %71 = vmatprep.subr.mxu0 0.0
    %72 = vmatpush1.xpose.msra.mxu0 0.0
    %73 = vmatprep.subr.mxu0 0.0
    %74 = vmatpush1.xpose.msra.mxu0 0.0
    %75 = vmatprep.subr.mxu0 0.0
    %76 = vmatpush1.xpose.msra.mxu0 0.0
    %77 = vmatprep.subr.mxu0 0.0
    %78 = vmatpush1.xpose.msra.mxu0 0.0
    %79 = vmatprep.subr.mxu0 0.0
    %80 = vmatpush1.xpose.msra.mxu0 0.0
    %81 = vmatprep.subr.mxu0 0.0
    %82 = vmatpush1.xpose.msra.mxu0 0.0
    %83 = vmatprep.subr.mxu0 0.0
    %84 = vmatpush1.xpose.msra.mxu0 0.0
    %85 = vmatprep.subr.mxu0 0.0
    %86 = vmatpush1.xpose.msra.mxu0 0.0
    %87 = vmatprep.subr.mxu0 0.0
    %88 = vmatpush1.xpose.msra.mxu0 0.0
    %89 = vmatprep.subr.mxu0 0.0
    %90 = vmatpush1.xpose.msra.mxu0 0.0
    %91 = vmatprep.subr.mxu0 0.0
    %92 = vmatpush1.xpose.msra.mxu0 0.0
    %93 = vmatprep.subr.mxu0 0.0
    %94 = vmatpush1.xpose.msra.mxu0 0.0
    %95 = vmatprep.mubr.f32.mxu0 %v28
    %96 = vmatmul.mubr.f32.gmra.mrb[0].mxu0 %v27
    %v97 = vpop.f32.mrb[0].mxu0
    %v98 = vadd.f32 0.0, %v97
    %v99 = vpop.f32.mrb[0].mxu0
    %100 = vdwg.mxu0
    %101 = vmatprep.subr.mxu0 %v30
    %102 = vmatpush1.xpose.msra.mxu0 %v29
    %103 = vmatprep.subr.mxu0 0.0
    %104 = vmatpush1.xpose.msra.mxu0 0.0
    %105 = vmatprep.subr.mxu0 0.0
    %106 = vmatpush1.xpose.msra.mxu0 0.0
    %107 = vmatprep.subr.mxu0 0.0
    %108 = vmatpush1.xpose.msra.mxu0 0.0
    %109 = vmatprep.subr.mxu0 0.0
    %110 = vmatpush1.xpose.msra.mxu0 0.0
    %111 = vmatprep.subr.mxu0 0.0
    %112 = vmatpush1.xpose.msra.mxu0 0.0
    %113 = vmatprep.subr.mxu0 0.0
    %114 = vmatpush1.xpose.msra.mxu0 0.0
    %115 = vmatprep.subr.mxu0 0.0
    %116 = vmatpush1.xpose.msra.mxu0 0.0
    %117 = vmatprep.subr.mxu0 0.0
    %118 = vmatpush1.xpose.msra.mxu0 0.0
    %119 = vmatprep.subr.mxu0 0.0
    %120 = vmatpush1.xpose.msra.mxu0 0.0
    %121 = vmatprep.subr.mxu0 0.0
    %122 = vmatpush1.xpose.msra.mxu0 0.0
    %123 = vmatprep.subr.mxu0 0.0
    %124 = vmatpush1.xpose.msra.mxu0 0.0
    %125 = vmatprep.subr.mxu0 0.0
    %126 = vmatpush1.xpose.msra.mxu0 0.0
    %127 = vmatprep.subr.mxu0 0.0
    %128 = vmatpush1.xpose.msra.mxu0 0.0
    %129 = vmatprep.subr.mxu0 0.0
    %130 = vmatpush1.xpose.msra.mxu0 0.0
    %131 = vmatprep.subr.mxu0 0.0
    %132 = vmatpush1.xpose.msra.mxu0 0.0
    %133 = vmatprep.subr.mxu0 0.0
    %134 = vmatpush1.xpose.msra.mxu0 0.0
    %135 = vmatprep.subr.mxu0 0.0
    %136 = vmatpush1.xpose.msra.mxu0 0.0
    %137 = vmatprep.subr.mxu0 0.0
    %138 = vmatpush1.xpose.msra.mxu0 0.0
    %139 = vmatprep.subr.mxu0 0.0
    %140 = vmatpush1.xpose.msra.mxu0 0.0
    %141 = vmatprep.subr.mxu0 0.0
    %142 = vmatpush1.xpose.msra.mxu0 0.0
    %143 = vmatprep.subr.mxu0 0.0
    %144 = vmatpush1.xpose.msra.mxu0 0.0
    %145 = vmatprep.subr.mxu0 0.0
    %146 = vmatpush1.xpose.msra.mxu0 0.0
    %147 = vmatprep.subr.mxu0 0.0
    %148 = vmatpush1.xpose.msra.mxu0 0.0
    %149 = vmatprep.subr.mxu0 0.0
    %150 = vmatpush1.xpose.msra.mxu0 0.0
    %151 = vmatprep.subr.mxu0 0.0
    %152 = vmatpush1.xpose.msra.mxu0 0.0
    %153 = vmatprep.subr.mxu0 0.0
    %154 = vmatpush1.xpose.msra.mxu0 0.0
    %155 = vmatprep.subr.mxu0 0.0
    %156 = vmatpush1.xpose.msra.mxu0 0.0
    %157 = vmatprep.subr.mxu0 0.0
    %158 = vmatpush1.xpose.msra.mxu0 0.0
    %159 = vmatprep.subr.mxu0 0.0
    %160 = vmatpush1.xpose.msra.mxu0 0.0
    %161 = vmatprep.subr.mxu0 0.0
    %162 = vmatpush1.xpose.msra.mxu0 0.0
    %163 = vmatprep.subr.mxu0 0.0
    %164 = vmatpush1.xpose.msra.mxu0 0.0
    %165 = vmatprep.mubr.f32.mxu0 %v30
    %166 = vmatmul.mubr.f32.gmra.mrb[0].mxu0 %v29
    %v167 = vpop.f32.mrb[0].mxu0
    %v168 = vadd.f32 0.0, %v167
    %v169 = vpop.f32.mrb[0].mxu0
    %170 = vdwg.mxu0
    %vm171 = vcmask 64512
    %v172 = vsel %vm171, %v98, inf
    %173 = vmin.xlane.f32.xlu0 %v172
    %v174 = vpop.xlane.xlu0 %173
    %v175 = vsel %vm171, %v168, inf
    %176 = vmin.xlane.f32.xlu0 %v175
    %v177 = vpop.xlane.xlu0 %176
    %v178 = vsub.f32 %v174, %v98
    %v179 = vsub.f32 %v177, %v168
    %v180 = vmul.f32 %v178, 1.442695
    %v181 = vpow.pop %v180
    %v182 = vmul.f32 %v179, 1.442695
    %v183 = vpow.pop %v182
    %v184 = vsel %vm171, %v181, 0.0
    %185 = vadd.xlane.f32.xlu0 %v184
    %v186 = vpop.xlane.xlu0 %185
    %v187 = vsel %vm171, %v183, 0.0
    %188 = vadd.xlane.f32.xlu0 %v187
    %v189 = vpop.xlane.xlu0 %188
    %v190 = vrcp.pop %v186
    %v191 = vrcp.pop %v189
    %v192 = vmul.f32 %v181, %v190
    %v193 = vmul.f32 %v183, %v191
    %v195 = vsel %vm171, %v192, 0
    %197 = vmatprep.subr.mxu0 %v28
    %198 = vmatpush1.msra.mxu0 %v27
    %199 = vmatprep.subr.mxu0 0.0
    %200 = vmatpush1.msra.mxu0 0.0
    %201 = vmatprep.subr.mxu0 0.0
    %202 = vmatpush1.msra.mxu0 0.0
    %203 = vmatprep.subr.mxu0 0.0
    %204 = vmatpush1.msra.mxu0 0.0
    %205 = vmatprep.subr.mxu0 0.0
    %206 = vmatpush1.msra.mxu0 0.0
    %207 = vmatprep.subr.mxu0 0.0
    %208 = vmatpush1.msra.mxu0 0.0
    %209 = vmatprep.subr.mxu0 0.0
    %210 = vmatpush1.msra.mxu0 0.0
    %211 = vmatprep.subr.mxu0 0.0
    %212 = vmatpush1.msra.mxu0 0.0
    %213 = vmatprep.subr.mxu0 0.0
    %214 = vmatpush1.msra.mxu0 0.0
    %215 = vmatprep.subr.mxu0 0.0
    %216 = vmatpush1.msra.mxu0 0.0
    %217 = vmatprep.subr.mxu0 0.0
    %218 = vmatpush1.msra.mxu0 0.0
    %219 = vmatprep.subr.mxu0 0.0
    %220 = vmatpush1.msra.mxu0 0.0
    %221 = vmatprep.subr.mxu0 0.0
    %222 = vmatpush1.msra.mxu0 0.0
    %223 = vmatprep.subr.mxu0 0.0
    %224 = vmatpush1.msra.mxu0 0.0
    %225 = vmatprep.subr.mxu0 0.0
    %226 = vmatpush1.msra.mxu0 0.0
    %227 = vmatprep.subr.mxu0 0.0
    %228 = vmatpush1.msra.mxu0 0.0
    %229 = vmatprep.subr.mxu0 0.0
    %230 = vmatpush1.msra.mxu0 0.0
    %231 = vmatprep.subr.mxu0 0.0
    %232 = vmatpush1.msra.mxu0 0.0
    %233 = vmatprep.subr.mxu0 0.0
    %234 = vmatpush1.msra.mxu0 0.0
    %235 = vmatprep.subr.mxu0 0.0
    %236 = vmatpush1.msra.mxu0 0.0
    %237 = vmatprep.subr.mxu0 0.0
    %238 = vmatpush1.msra.mxu0 0.0
    %239 = vmatprep.subr.mxu0 0.0
    %240 = vmatpush1.msra.mxu0 0.0
    %241 = vmatprep.subr.mxu0 0.0
    %242 = vmatpush1.msra.mxu0 0.0
    %243 = vmatprep.subr.mxu0 0.0
    %244 = vmatpush1.msra.mxu0 0.0
    %245 = vmatprep.subr.mxu0 0.0
    %246 = vmatpush1.msra.mxu0 0.0
    %247 = vmatprep.subr.mxu0 0.0
    %248 = vmatpush1.msra.mxu0 0.0
    %249 = vmatprep.subr.mxu0 0.0
    %250 = vmatpush1.msra.mxu0 0.0
    %251 = vmatprep.subr.mxu0 0.0
    %252 = vmatpush1.msra.mxu0 0.0
    %253 = vmatprep.subr.mxu0 0.0
    %254 = vmatpush1.msra.mxu0 0.0
    %255 = vmatprep.subr.mxu0 0.0
    %256 = vmatpush1.msra.mxu0 0.0
    %257 = vmatprep.subr.mxu0 0.0
    %258 = vmatpush1.msra.mxu0 0.0
    %259 = vmatprep.subr.mxu0 0.0
    %260 = vmatpush1.msra.mxu0 0.0
    %261 = vmatprep.mubr.f32.mxu0 0.0
    %262 = vmatmul.mubr.f32.gmra.mrb[0].mxu0 %v195
    %v263 = vpop.f32.mrb[0].mxu0
    %v264 = vadd.f32 0.0, %v263
    %v265 = vpop.f32.mrb[0].mxu0
    %v266 = vadd.f32 0.0, %v265
    %267 = vdwg.mxu0
    %v269 = vsel %vm171, %v193, 0
    %271 = vmatprep.subr.mxu0 %v30
    %272 = vmatpush1.msra.mxu0 %v29
    %273 = vmatprep.subr.mxu0 0.0
    %274 = vmatpush1.msra.mxu0 0.0
    %275 = vmatprep.subr.mxu0 0.0
    %276 = vmatpush1.msra.mxu0 0.0
    %277 = vmatprep.subr.mxu0 0.0
    %278 = vmatpush1.msra.mxu0 0.0
    %279 = vmatprep.subr.mxu0 0.0
    %280 = vmatpush1.msra.mxu0 0.0
    %281 = vmatprep.subr.mxu0 0.0
    %282 = vmatpush1.msra.mxu0 0.0
    %283 = vmatprep.subr.mxu0 0.0
    %284 = vmatpush1.msra.mxu0 0.0
    %285 = vmatprep.subr.mxu0 0.0
    %286 = vmatpush1.msra.mxu0 0.0
    %287 = vmatprep.subr.mxu0 0.0
    %288 = vmatpush1.msra.mxu0 0.0
    %289 = vmatprep.subr.mxu0 0.0
    %290 = vmatpush1.msra.mxu0 0.0
    %291 = vmatprep.subr.mxu0 0.0
    %292 = vmatpush1.msra.mxu0 0.0
    %293 = vmatprep.subr.mxu0 0.0
    %294 = vmatpush1.msra.mxu0 0.0
    %295 = vmatprep.subr.mxu0 0.0
    %296 = vmatpush1.msra.mxu0 0.0
    %297 = vmatprep.subr.mxu0 0.0
    %298 = vmatpush1.msra.mxu0 0.0
    %299 = vmatprep.subr.mxu0 0.0
    %300 = vmatpush1.msra.mxu0 0.0
    %301 = vmatprep.subr.mxu0 0.0
    %302 = vmatpush1.msra.mxu0 0.0
    %303 = vmatprep.subr.mxu0 0.0
    %304 = vmatpush1.msra.mxu0 0.0
    %305 = vmatprep.subr.mxu0 0.0
    %306 = vmatpush1.msra.mxu0 0.0
    %307 = vmatprep.subr.mxu0 0.0
    %308 = vmatpush1.msra.mxu0 0.0
    %309 = vmatprep.subr.mxu0 0.0
    %310 = vmatpush1.msra.mxu0 0.0
    %311 = vmatprep.subr.mxu0 0.0
    %312 = vmatpush1.msra.mxu0 0.0
    %313 = vmatprep.subr.mxu0 0.0
    %314 = vmatpush1.msra.mxu0 0.0
    %315 = vmatprep.subr.mxu0 0.0
    %316 = vmatpush1.msra.mxu0 0.0
    %317 = vmatprep.subr.mxu0 0.0
    %318 = vmatpush1.msra.mxu0 0.0
    %319 = vmatprep.subr.mxu0 0.0
    %320 = vmatpush1.msra.mxu0 0.0
    %321 = vmatprep.subr.mxu0 0.0
    %322 = vmatpush1.msra.mxu0 0.0
    %323 = vmatprep.subr.mxu0 0.0
    %324 = vmatpush1.msra.mxu0 0.0
    %325 = vmatprep.subr.mxu0 0.0
    %326 = vmatpush1.msra.mxu0 0.0
    %327 = vmatprep.subr.mxu0 0.0
    %328 = vmatpush1.msra.mxu0 0.0
    %329 = vmatprep.subr.mxu0 0.0
    %330 = vmatpush1.msra.mxu0 0.0
    %331 = vmatprep.subr.mxu0 0.0
    %332 = vmatpush1.msra.mxu0 0.0
    %333 = vmatprep.subr.mxu0 0.0
    %334 = vmatpush1.msra.mxu0 0.0
    %335 = vmatprep.mubr.f32.mxu0 0.0
    %336 = vmatmul.mubr.f32.gmra.mrb[0].mxu0 %v269
    %v337 = vpop.f32.mrb[0].mxu0
    %v338 = vadd.f32 0.0, %v337
    %v339 = vpop.f32.mrb[0].mxu0
    %v340 = vadd.f32 0.0, %v339
    %341 = vdwg.mxu0
    %s342 = sld [smem:[#allocation2]]
    %v343 = vstv %s342
    %v344 = vmul.f32 %v343, %v264
    %v345 = vmul.f32 %v343, %v266
    %v346 = vmul.f32 %v343, %v338
    %v347 = vmul.f32 %v343, %v340
    %v348 = vadd.f32 %v344, %v27
    %v349 = vadd.f32 %v345, %v28
    %v350 = vadd.f32 %v346, %v29
    %v351 = vadd.f32 %v347, %v30
    %352 = vst [vmem:[#allocation6] sm:$0xff] %v348
    %353 = vst [vmem:[#allocation6 + $0x8] sm:$0xff] %v349
    %354 = vst [vmem:[#allocation6 + $0x10] sm:$0xff] %v350
    %355 = vst [vmem:[#allocation6 + $0x18] sm:$0xff] %v351
    // Predicated region
    $region14: #{tpu_custom_call.1} parent=1 // pred_check
      _
    $region15: #{tpu_custom_call.1} parent=1 // pred_check_branch
      %357 = sbr.rel (0) target = $region17
    $region16: #{tpu_custom_call.1} parent=1 // pred_region
      %s359 = ssub.s32 512, 512
      %360 = vsyncadd [#allocation5], %s359
      %s361 = sshll.u32 [#allocation6], 4
      %s362 = int_to_ptr.vmem [resolvable:$true] %s361
      %367 = dma.vmem_to_hbm [thread:$0]  %s362, 512, %s2, [#allocation5], 256, 256, 16
    $region17: #{tpu_custom_call.1} parent=1 // pred_fallthru
      _
    // Predicated region
    $region18: #{tpu_custom_call.1} parent=1 // pred_check
      _
    $region19: #{tpu_custom_call.1} parent=1 // pred_check_branch
      %369 = sbr.rel (0) target = $region21
    $region20: #{tpu_custom_call.1} parent=1 // pred_region
      %370 = dma.done [#allocation5], 512
    $region21: #{tpu_custom_call.1} parent=1 // pred_fallthru
      _
    %371 = vsyncpa [#allocation4], 1
    %372 = vsyncpa [#allocation5], 1

</llo_original>
